<compile_context>
chip_gen: v5e
topology: v5e:2x2
jax: 0.10.0
libtpu: 0.0.40
codegen_flags: <defaults>
</compile_context>

<pallas_src>
import math

import jax
import jax.numpy as jnp
from jax.experimental import pallas as pl
from jax.experimental.pallas import tpu as pltpu


def _pick_tile(n, preferred=128):
    """Largest power-of-two tile <= preferred that divides n (else n itself)."""
    if n <= preferred:
        return n
    t = preferred
    while t >= 8:
        if n % t == 0:
            return t
        t //= 2
    return n


# ----------------------------------------------------------------------------
# Kernel 1: pairwise squared distance  (B, N, 3) -> (B, N, N)
# MXU form: ||p_i||^2 + ||p_j||^2 - 2 * p_i . p_j, tiled over query rows.
# ----------------------------------------------------------------------------
def _sqdist_kernel(src_ref, dst_ref, out_ref):
    src = src_ref[0]                                   # (TR, 3)
    dst = dst_ref[0]                                   # (N, 3)
    gram = jax.lax.dot_general(
        src, dst, (((1,), (1,)), ((), ())),
        preferred_element_type=jnp.float32)            # (TR, N)
    s2 = jnp.sum(src * src, axis=-1, keepdims=True)    # (TR, 1)
    d2 = jnp.sum(dst * dst, axis=-1)[None, :]          # (1, N)
    out_ref[0] = s2 + d2 - 2.0 * gram


def pairwise_sqdist(pos, tile_rows):
    B, N, C = pos.shape
    grid = (B, N // tile_rows)
    return pl.pallas_call(
        _sqdist_kernel,
        out_shape=jax.ShapeDtypeStruct((B, N, N), jnp.float32),
        grid=grid,
        in_specs=[pl.BlockSpec((1, tile_rows, C), lambda b, r: (b, r, 0)),
                  pl.BlockSpec((1, N, C), lambda b, r: (b, 0, 0))],
        out_specs=pl.BlockSpec((1, tile_rows, N), lambda b, r: (b, r, 0)),
        compiler_params=pltpu.CompilerParams(
            dimension_semantics=("parallel", "parallel")),
    )(pos, pos)


# ----------------------------------------------------------------------------
# Kernel 2: fused q/k/v projection  (B, N, D) @ (D, 3D) -> (B, N, 3D)
# ----------------------------------------------------------------------------
def _qkv_kernel(x_ref, w_ref, out_ref):
    out_ref[0] = jnp.dot(x_ref[0], w_ref[...],
                         preferred_element_type=jnp.float32)


def qkv_project(x, wqkv, tile_n):
    B, N, D = x.shape
    D3 = wqkv.shape[1]
    grid = (B, N // tile_n)
    return pl.pallas_call(
        _qkv_kernel,
        out_shape=jax.ShapeDtypeStruct((B, N, D3), jnp.float32),
        grid=grid,
        in_specs=[pl.BlockSpec((1, tile_n, D), lambda b, n: (b, n, 0)),
                  pl.BlockSpec((D, D3), lambda b, n: (0, 0))],
        out_specs=pl.BlockSpec((1, tile_n, D3), lambda b, n: (b, n, 0)),
        compiler_params=pltpu.CompilerParams(
            dimension_semantics=("parallel", "parallel")),
    )(x, wqkv)


# ----------------------------------------------------------------------------
# Kernel 3: main point-transformer attention block.
# grid = (B, N // TILE_N): TILE_N query points per step.  Gathered tensors are
# flattened to (TILE_N*K, C) for the MLP matmuls (M-dim batching on the MXU),
# then reshaped to (TILE_N, K, D) for softmax over the neighbor axis and the
# weighted aggregation.  Output stored as a full (TILE_N, D) slab.
# ----------------------------------------------------------------------------
def _ptblock_kernel(q_ref, kg_ref, vg_ref, rel_ref, xpre_ref,
                    w1_ref, b1_ref, w2_ref, b2_ref,
                    w3_ref, b3_ref, w4_ref, b4_ref,
                    w5_ref, b5_ref, out_ref):
    _, TN, K, D = kg_ref.shape
    inv_scale = 1.0 / math.sqrt(D)

    kg3 = kg_ref[0]                                    # (TN, K, D)
    vg3 = vg_ref[0]                                    # (TN, K, D)
    rel = rel_ref[0].reshape(TN * K, 3)                # (TN*K, 3)
    q = q_ref[0]                                       # (TN, D)

    # pos_mlp: Linear(3, D) -> ReLU -> Linear(D, D), batched over TN*K rows.
    h = jnp.dot(rel, w1_ref[...], preferred_element_type=jnp.float32) + b1_ref[...]
    h = jnp.maximum(h, 0.0)
    pe = jnp.dot(h, w2_ref[...], preferred_element_type=jnp.float32) + b2_ref[...]
    pe3 = pe.reshape(TN, K, D)                         # (TN, K, D)

    # attn_mlp on (q - k + pos_enc), flattened for the matmuls.
    t = (q[:, None, :] - kg3 + pe3).reshape(TN * K, D)
    h2 = jnp.dot(t, w3_ref[...], preferred_element_type=jnp.float32) + b3_ref[...]
    h2 = jnp.maximum(h2, 0.0)
    logits = jnp.dot(h2, w4_ref[...], preferred_element_type=jnp.float32) + b4_ref[...]
    logits = logits.reshape(TN, K, D) * inv_scale      # (TN, K, D)

    # softmax over the neighbor axis (torch dim=-2 -> axis 1 here).
    logits = logits - jnp.max(logits, axis=1, keepdims=True)
    e = jnp.exp(logits)
    denom = jnp.sum(e, axis=1, keepdims=True)
    attn = e * pl.reciprocal(denom, approx=True)       # (TN, K, D)

    # einsum('b i j d, b i j d -> b i d', attn, v + pos_enc)
    agg = jnp.sum(attn * (vg3 + pe3), axis=1)          # (TN, D)

    out = jnp.dot(agg, w5_ref[...], preferred_element_type=jnp.float32) + b5_ref[...]
    out_ref[0] = out + xpre_ref[0]                     # lane-dense (TN, D) store


def ptblock_attention(q, kf, vf, rel, x_pre, params, tile_n):
    B, N, D = q.shape
    K = kf.shape[2]
    grid = (B, N // tile_n)

    def w_spec(shape):
        nd = len(shape)
        return pl.BlockSpec(shape, lambda b, n, _nd=nd: (0,) * _nd)

    bn_tile = pl.BlockSpec((1, tile_n, D), lambda b, n: (b, n, 0))
    kd_tile = pl.BlockSpec((1, tile_n, K, D), lambda b, n: (b, n, 0, 0))
    k3_tile = pl.BlockSpec((1, tile_n, K, 3), lambda b, n: (b, n, 0, 0))

    in_specs = [bn_tile, kd_tile, kd_tile, k3_tile, bn_tile,
                w_spec((3, D)), w_spec((1, D)), w_spec((D, D)), w_spec((1, D)),
                w_spec((D, D)), w_spec((1, D)), w_spec((D, D)), w_spec((1, D)),
                w_spec((D, D)), w_spec((1, D))]

    return pl.pallas_call(
        _ptblock_kernel,
        out_shape=jax.ShapeDtypeStruct((B, N, D), jnp.float32),
        grid=grid,
        in_specs=in_specs,
        out_specs=bn_tile,
        compiler_params=pltpu.CompilerParams(
            dimension_semantics=("parallel", "parallel")),
    )(q, kf, vf, rel, x_pre,
      params['w1'], params['b1'], params['w2'], params['b2'],
      params['w3'], params['b3'], params['w4'], params['b4'],
      params['w5'], params['b5'])


# ----------------------------------------------------------------------------
# JAX glue: index gathers (torch.gather / index_points equivalent)
# ----------------------------------------------------------------------------
def gather_points(points, idx):
    # points: (B, N, C), idx: (B, S, K) -> (B, S, K, C)
    B, S, K = idx.shape
    flat = idx.reshape(B, S * K)
    out = jnp.take_along_axis(points, flat[:, :, None], axis=1)
    return out.reshape(B, S, K, points.shape[-1])


# ----------------------------------------------------------------------------
# Full forward pass (Pallas path)
# ----------------------------------------------------------------------------
def point_transformer_block(x, pos, params, k):
    B, N, D = x.shape
    tile_n = _pick_tile(N)

    dists = pairwise_sqdist(pos, tile_n)                       # Pallas (MXU form)
    # TODO(synk): kNN index selection (top-k of distances) stays in XLA;
    # a Pallas partial-sort brings no benefit at these sizes.
    _, knn_idx = jax.lax.top_k(-dists, k)                      # (B, N, k)

    wqkv = jnp.concatenate([params['wq'], params['wk'], params['wv']], axis=1)
    qkv = qkv_project(x, wqkv, tile_n)                         # Pallas, fused proj
    q = qkv[..., :D]
    k_all = qkv[..., D:2 * D]
    v_all = qkv[..., 2 * D:]

    # TODO(synk): fuse these gathers into the attention kernel (scalar-prefetch
    # knn_idx + in-kernel row gather from a VMEM-resident (N, D) tile) to remove
    # the K x HBM read/write amplification of take_along_axis.
    kf = gather_points(k_all, knn_idx)                         # (B, N, k, D)
    vf = gather_points(v_all, knn_idx)                         # (B, N, k, D)
    knn_xyz = gather_points(pos, knn_idx)                      # (B, N, k, 3)
    rel = pos[:, :, None, :] - knn_xyz                         # (B, N, k, 3)

    return ptblock_attention(q, kf, vf, rel, x, params, tile_n)  # Pallas


# ----------------------------------------------------------------------------
# Pure-JAX reference (mirrors the PyTorch forward) for verification
# ----------------------------------------------------------------------------
def reference_forward(x, pos, params, k):
    B, N, D = x.shape
    dists = jnp.sum((pos[:, :, None, :] - pos[:, None, :, :]) ** 2, axis=-1)
    knn_idx = jnp.argsort(dists, axis=-1)[:, :, :k]
    knn_xyz = gather_points(pos, knn_idx)
    q = x @ params['wq']
    kf = gather_points(x @ params['wk'], knn_idx)
    vf = gather_points(x @ params['wv'], knn_idx)
    rel = pos[:, :, None, :] - knn_xyz
    pos_enc = jax.nn.relu(rel @ params['w1'] + params['b1']) @ params['w2'] + params['b2']
    t = q[:, :, None, :] - kf + pos_enc
    attn = jax.nn.relu(t @ params['w3'] + params['b3']) @ params['w4'] + params['b4']
    attn = jax.nn.softmax(attn / math.sqrt(D), axis=-2)
    agg = jnp.sum(attn * (vf + pos_enc), axis=2)
    return agg @ params['w5'] + params['b5'] + x


# ----------------------------------------------------------------------------
# Deterministic parameter init (shapes from PointTransformerBlock.__init__)
# Note: prev_linear is defined in __init__ but never used in forward -> omitted.
# ----------------------------------------------------------------------------
def init_params(key, dim):
    keys = jax.random.split(key, 13)
    s = 0.1

    def w(kk, shape):
        return jax.random.normal(kk, shape, jnp.float32) * s

    return {
        'wq': w(keys[0], (dim, dim)),   # to_q (no bias)
        'wk': w(keys[1], (dim, dim)),   # to_k (no bias)
        'wv': w(keys[2], (dim, dim)),   # to_v (no bias)
        'w1': w(keys[3], (3, dim)),   'b1': w(keys[4], (1, dim)),    # pos_mlp[0]
        'w2': w(keys[5], (dim, dim)), 'b2': w(keys[6], (1, dim)),    # pos_mlp[2]
        'w3': w(keys[7], (dim, dim)), 'b3': w(keys[8], (1, dim)),    # attn_mlp[0]
        'w4': w(keys[9], (dim, dim)), 'b4': w(keys[10], (1, dim)),   # attn_mlp[2]
        'w5': w(keys[11], (dim, dim)), 'b5': w(keys[12], (1, dim)),  # final_linear
    }


if __name__ == "__main__":
    B, N, D, K = 2, 16, 32, 8
    key = jax.random.PRNGKey(0)
    kx, kp, kw = jax.random.split(key, 3)
    x = jax.random.normal(kx, (B, N, D), jnp.float32)
    pos = jax.random.normal(kp, (B, N, 3), jnp.float32)
    params = init_params(kw, D)

    out = point_transformer_block(x, pos, params, K)
    out = jax.block_until_ready(out)

    ref = reference_forward(x, pos, params, K)
    assert out.shape == (B, N, D)
    assert bool(jnp.all(jnp.isfinite(out)))
    max_err = float(jnp.max(jnp.abs(out - ref)))
    if not bool(jnp.allclose(out, ref, atol=2e-2, rtol=2e-2)):
        raise AssertionError(f"mismatch vs reference, max abs err = {max_err:e}")

    print("KERNEL_OK")
</pallas_src>

<mosaic_0001>
module attributes {stable_mosaic.version = 11 : i64} {
  func.func @_sqdist_kernel(%arg0: i32, %arg1: i32, %arg2: memref<1x16x3xf32, #tpu.memory_space<vmem>>, %arg3: memref<1x16x3xf32, #tpu.memory_space<vmem>>, %arg4: memref<1x16x16xf32, #tpu.memory_space<vmem>>) attributes {dimension_semantics = [#tpu.dimension_semantics<parallel>, #tpu.dimension_semantics<parallel>], iteration_bounds = array<i64: 2, 1>, scalar_prefetch = 0 : i64, scratch_operands = 0 : i64, tpu.core_type = #tpu.core_type<tc>, window_params = [{transform_indices = @transform_0, window_bounds = array<i64: 1, 16, 3>}, {transform_indices = @transform_1, window_bounds = array<i64: 1, 16, 3>}, {transform_indices = @transform_2, window_bounds = array<i64: 1, 16, 16>}]} {
    %c0 = arith.constant 0 : index
    %c0_0 = arith.constant 0 : index
    %c0_1 = arith.constant 0 : index
    %0 = vector.load %arg2[%c0, %c0_0, %c0_1] : memref<1x16x3xf32, #tpu.memory_space<vmem>>, vector<1x16x3xf32>
    %1 = vector.shape_cast %0 : vector<1x16x3xf32> to vector<16x3xf32>
    %c0_2 = arith.constant 0 : index
    %c0_3 = arith.constant 0 : index
    %c0_4 = arith.constant 0 : index
    %2 = vector.load %arg3[%c0_2, %c0_3, %c0_4] : memref<1x16x3xf32, #tpu.memory_space<vmem>>, vector<1x16x3xf32>
    %3 = vector.shape_cast %2 : vector<1x16x3xf32> to vector<16x3xf32>
    %cst = arith.constant dense<0.000000e+00> : vector<16x16xf32>
    %4 = tpu.matmul %1, %3, %cst {dimension_numbers = #tpu.dot_dimension_numbers<[1], [1], [0], [0], [0, 0, 1, 0], [], []>} : vector<16x3xf32>, vector<16x3xf32>, vector<16x16xf32> -> vector<16x16xf32>
    %5 = arith.mulf %1, %1 : vector<16x3xf32>
    %cst_5 = arith.constant dense<0.000000e+00> : vector<16xf32>
    %6 = vector.multi_reduction <add>, %5, %cst_5 [1] : vector<16x3xf32> to vector<16xf32>
    %7 = vector.shape_cast %6 : vector<16xf32> to vector<16x1xf32>
    %8 = arith.mulf %3, %3 : vector<16x3xf32>
    %cst_6 = arith.constant dense<0.000000e+00> : vector<16xf32>
    %9 = vector.multi_reduction <add>, %8, %cst_6 [1] : vector<16x3xf32> to vector<16xf32>
    %10 = vector.shape_cast %9 : vector<16xf32> to vector<1x16xf32>
    %11 = vector.broadcast %7 : vector<16x1xf32> to vector<16x16xf32>
    %12 = vector.broadcast %10 : vector<1x16xf32> to vector<16x16xf32>
    %13 = arith.addf %11, %12 : vector<16x16xf32>
    %cst_7 = arith.constant 2.000000e+00 : f32
    %14 = vector.broadcast %cst_7 : f32 to vector<16x16xf32>
    %15 = arith.mulf %14, %4 : vector<16x16xf32>
    %16 = arith.subf %13, %15 : vector<16x16xf32>
    %c0_8 = arith.constant 0 : index
    %c0_9 = arith.constant 0 : index
    %c0_10 = arith.constant 0 : index
    %17 = vector.load %arg4[%c0_8, %c0_9, %c0_10] : memref<1x16x16xf32, #tpu.memory_space<vmem>>, vector<1x16x16xf32>
    %18 = vector.shape_cast %17 : vector<1x16x16xf32> to vector<16x16xf32>
    %19 = vector.shape_cast %16 : vector<16x16xf32> to vector<1x16x16xf32>
    tpu.vector_store %arg4[%c0_8, %c0_9, %c0_10], %19 {strides = array<i32>} : memref<1x16x16xf32, #tpu.memory_space<vmem>>, vector<1x16x16xf32>,
    return
  }
  func.func @transform_0(%arg0: i32, %arg1: i32) -> (i32, i32, i32) {
    %c0_i32 = arith.constant 0 : i32
    %c0_i32_0 = arith.constant 0 : i32
    return %arg0, %arg1, %c0_i32 : i32, i32, i32
  }
  func.func @transform_1(%arg0: i32, %arg1: i32) -> (i32, i32, i32) {
    %c0_i32 = arith.constant 0 : i32
    %c0_i32_0 = arith.constant 0 : i32
    %c0_i32_1 = arith.constant 0 : i32
    return %arg0, %c0_i32, %c0_i32_0 : i32, i32, i32
  }
  func.func @transform_2(%arg0: i32, %arg1: i32) -> (i32, i32, i32) {
    %c0_i32 = arith.constant 0 : i32
    %c0_i32_0 = arith.constant 0 : i32
    return %arg0, %arg1, %c0_i32 : i32, i32, i32
  }
}

</mosaic_0001>

<llo_original>
// kernel: tpu_custom_call.1
$region0: #{tpu_custom_call.1}
  #allocation0 [shape = 'u32[]', space=smem, size = 0x4, offset = 0x4, fixed_abs, tag = 'smem constant byte address 0x4 - core index']
  #allocation1 [shape = 'u32[72,128]{1,0:T(1,128)}', space=vmem, size = 0x9000, scoped, tag = 'internal scratch']
  %s0 = inlined_call_operand.vmem [shape: f32[2,16,3], index: 0, kind: input, shape index: {}]
  %s1 = inlined_call_operand.vmem [shape: f32[2,16,3], index: 1, kind: input, shape index: {}]
  %s2 = inlined_call_operand.hbm [shape: f32[2,16,16], index: 2, kind: output, shape index: {}]
  %s3 = sld [smem:[#allocation0]]
  $region41: #{tpu_custom_call.1} parent=0
    _
  %s5 = ssub.s32 1, %s3
  %s6 = scalar_select 0, %s5, %s3
  $region1: #{tpu_custom_call.1} parent=0
    #allocation2 [shape = 'u8[16384]{0}', space=vmem, size = 0x4000, scoped, tag = 'output window, operand 0']
    #allocation3 [shape = 's32[2]{0}', space=sflag, size = 0x8, scoped, tag = 'scoped memory for tpu_custom_call.1']
    %7 = vsyncpa [#allocation3], 0
    %s8 = scalar_lea.sflag [#allocation3], 1
    %9 = vsyncpa %s8, 0
    loop: start=0, step=1, limit=4
    $region2: #{tpu_custom_call.1} parent=1 // loop_pre_header
      _
    $region3: #{tpu_custom_call.1} parent=1 // loop_header
      %s11 = sphi 0, %s15
      %p12 = scmp.ge.s32.totalorder %s11, 4
      %s18 = sphi 0, %s30
      %s19 = sphi 0, %s26
      %s20 = sphi 0, %s18
      %s21 = sphi 0, %s19
      %s22 = sphi 0, %s20
      %s23 = sphi 0, %s21
      %s35 = sphi 0, %s37
      %s38 = sphi 0, %s35
      %s39 = sphi 0, %s38
      %s55 = sphi 0, %s39
      %s61 = sphi 0, %s63
      %s64 = sphi 0, %s61
      %s65 = sphi 0, %s64
      %s81 = sphi 0, %s65
      %s89 = sphi 0, %s91
      %s92 = sphi 0, %s89
      %s93 = sphi 0, %s92
      %s109 = sphi 0, %s93
    $region4: #{tpu_custom_call.1} parent=1 // loop_header_branch
      %14 = sbr.rel (%p12) target = $region8
    $region5: #{tpu_custom_call.1} parent=1 // loop_body
      %s16 = ssub.s32 %s11, 1
      %s17 = ssub.s32 %s11, 2
      %s24 = sadd.s32 1, %s19
      %p25 = scmp.ge.s32.totalorder %s24, 1
      %s26 = scalar_select %p25, 0, %s24
      %s27 = sadd.s32 1, %s18
      %s28 = scalar_select %p25, %s27, %s18
      %p29 = scmp.ge.s32.totalorder %s28, 2
      %s30 = scalar_select %p29, 0, %s28
      %s31 = ssub.s32 %s18, %s30
      %s32 = ssub.s32 %s19, %s26
      %s33 = sor.u32 %s31, %s32
      %p34 = scmp.eq.s32.totalorder %s33, 0
      %s36 = sadd.s32 %s35, 1
      %s37 = scalar_select %p34, %s35, %s36
      %p40 = pneg %p34
      %p41 = scmp.eq.s32.totalorder %s11, 1
      %p42 = por %p40, %p41
      %p43 = scmp.ne.s32.totalorder %s35, %s38
      %p44 = scmp.eq.s32.totalorder %s11, 0
      %p45 = por %p43, %p44
      %p46 = scmp.ne.s32.totalorder %s35, %s38
      %p47 = scmp.eq.s32.totalorder %s16, 1
      %p48 = por %p46, %p47
      %p49 = scmp.ne.s32.totalorder %s38, %s39
      %p50 = scmp.eq.s32.totalorder %s16, 0
      %p51 = por %p49, %p50
      %p52 = scmp.ne.s32.totalorder %s38, %s39
      %p53 = scmp.eq.s32.totalorder %s17, 1
      %p54 = por %p52, %p53
      %p56 = scmp.ne.s32.totalorder %s39, %s55
      %p57 = scmp.eq.s32.totalorder %s17, 0
      %p58 = por %p56, %p57
      %s59 = ssub.s32 %s18, %s30
      %p60 = scmp.eq.s32.totalorder %s59, 0
      %s62 = sadd.s32 %s61, 1
      %s63 = scalar_select %p60, %s61, %s62
      %p66 = pneg %p60
      %p67 = scmp.eq.s32.totalorder %s11, 1
      %p68 = por %p66, %p67
      %p69 = scmp.ne.s32.totalorder %s61, %s64
      %p70 = scmp.eq.s32.totalorder %s11, 0
      %p71 = por %p69, %p70
      %p72 = scmp.ne.s32.totalorder %s61, %s64
      %p73 = scmp.eq.s32.totalorder %s16, 1
      %p74 = por %p72, %p73
      %p75 = scmp.ne.s32.totalorder %s64, %s65
      %p76 = scmp.eq.s32.totalorder %s16, 0
      %p77 = por %p75, %p76
      %p78 = scmp.ne.s32.totalorder %s64, %s65
      %p79 = scmp.eq.s32.totalorder %s17, 1
      %p80 = por %p78, %p79
      %p82 = scmp.ne.s32.totalorder %s65, %s81
      %p83 = scmp.eq.s32.totalorder %s17, 0
      %p84 = por %p82, %p83
      %s85 = ssub.s32 %s18, %s30
      %s86 = ssub.s32 %s19, %s26
      %s87 = sor.u32 %s85, %s86
      %p88 = scmp.eq.s32.totalorder %s87, 0
      %s90 = sadd.s32 %s89, 1
      %s91 = scalar_select %p88, %s89, %s90
      %p94 = pneg %p88
      %p95 = scmp.eq.s32.totalorder %s11, 1
      %p96 = por %p94, %p95
      %p97 = scmp.ne.s32.totalorder %s89, %s92
      %p98 = scmp.eq.s32.totalorder %s11, 0
      %p99 = por %p97, %p98
      %p100 = scmp.ne.s32.totalorder %s89, %s92
      %p101 = scmp.eq.s32.totalorder %s16, 1
      %p102 = por %p100, %p101
      %p103 = scmp.ne.s32.totalorder %s92, %s93
      %p104 = scmp.eq.s32.totalorder %s16, 0
      %p105 = por %p103, %p104
      %p106 = scmp.ne.s32.totalorder %s92, %s93
      %p107 = scmp.eq.s32.totalorder %s17, 1
      %p108 = por %p106, %p107
      %p110 = scmp.ne.s32.totalorder %s93, %s109
      %p111 = scmp.eq.s32.totalorder %s17, 0
      %p112 = por %p110, %p111
      %p113 = scmp.le.s32.totalorder 1, %s11
      %p114 = scmp.lt.s32.totalorder %s11, 3
      %p115 = pnand %p113, %p114
      %p116 = pneg %p115
      // Predicated region
      $region9: #{tpu_custom_call.1} parent=5 // pred_check
        _
      $region10: #{tpu_custom_call.1} parent=5 // pred_check_branch
        %118 = sbr.rel (%p115) target = $region12
      $region11: #{tpu_custom_call.1} parent=5 // pred_region
        %s119 = ssub.s32 %s11, 1
      $region12: #{tpu_custom_call.1} parent=5 // pred_fallthru
        _
      %p120 = scmp.lt.s32.totalorder %s11, 2
      // Predicated region
      $region13: #{tpu_custom_call.1} parent=5 // pred_check
        %p121 = pneg %p120
      $region14: #{tpu_custom_call.1} parent=5 // pred_check_branch
        %123 = sbr.rel (%p121) target = $region16
      $region15: #{tpu_custom_call.1} parent=5 // pred_region
        // Predicated region
        $region17: #{tpu_custom_call.1} parent=15 // pred_check
          %p124 = pneg %p45
        $region18: #{tpu_custom_call.1} parent=15 // pred_check_branch
          %126 = sbr.rel (%p124) target = $region20
        $region19: #{tpu_custom_call.1} parent=15 // pred_region
          %s127 = smul.u32 2, %s19
          %p128 = scmp.lt.s32.totalorder %s18, 1
          %s129 = scalar_select %p128, %s18, 1
          %p130 = scmp.lt.s32.totalorder %s127, 1
          %s131 = scalar_select %p130, %s127, 1
          %s132 = smul.addr %s129, 2
          %s133 = sadd.s32 %s131, %s132
          %s134 = smul.addr %s133, 8
          %s135 = scalar_lea.vmem %s0, %s134
          %s136 = smul.u32 2, %s19
        $region20: #{tpu_custom_call.1} parent=15 // pred_fallthru
          _
        // Predicated region
        $region21: #{tpu_custom_call.1} parent=15 // pred_check
          %p137 = pneg %p71
        $region22: #{tpu_custom_call.1} parent=15 // pred_check_branch
          %139 = sbr.rel (%p137) target = $region24
        $region23: #{tpu_custom_call.1} parent=15 // pred_region
          %p140 = scmp.lt.s32.totalorder %s18, 1
          %s141 = scalar_select %p140, %s18, 1
          %s142 = smul.addr %s141, 2
          %s143 = smul.addr %s142, 8
          %s144 = scalar_lea.vmem %s1, %s143
        $region24: #{tpu_custom_call.1} parent=15 // pred_fallthru
          _
      $region16: #{tpu_custom_call.1} parent=5 // pred_fallthru
        _
      %p145 = scmp.le.s32.totalorder 1, %s11
      %p146 = scmp.lt.s32.totalorder %s11, 3
      %p147 = pnand %p145, %p146
      %p148 = pneg %p147
      // Predicated region
      $region25: #{tpu_custom_call.1} parent=5 // pred_check
        _
      $region26: #{tpu_custom_call.1} parent=5 // pred_check_branch
        %150 = sbr.rel (%p147) target = $region28
      $region27: #{tpu_custom_call.1} parent=5 // pred_region
        %s151 = ssub.s32 %s11, 1
        %s152 = smul.u32 2, %s21
        %p153 = scmp.lt.s32.totalorder %s20, 1
        %s154 = scalar_select %p153, %s20, 1
        %p155 = scmp.lt.s32.totalorder %s152, 1
        %s156 = scalar_select %p155, %s152, 1
        %s157 = smul.addr %s154, 2
        %s158 = sadd.s32 %s156, %s157
        %s159 = smul.addr %s158, 8
        %s160 = scalar_lea.vmem %s0, %s159
        %p161 = pneg %p51
        %p162 = pneg %p48
        %p163 = scmp.lt.s32.totalorder %s20, 1
        %s164 = scalar_select %p163, %s20, 1
        %s165 = smul.addr %s164, 2
        %s166 = smul.addr %s165, 8
        %s167 = scalar_lea.vmem %s1, %s166
        %p168 = pneg %p77
        %p169 = pneg %p74
        %p170 = pneg %p105
        %p171 = pneg %p102
        %s172 = sand.u32 %s92, 1
        %s173 = scalar_lea.sflag [#allocation3], %s172
        %s174 = sand.u32 %s92, 1
        %s175 = smul.addr %s174, 16
        %s176 = scalar_lea.vmem [#allocation2], %s175
        %s177 = smul.u32 2, %s21
        %p178 = scmp.lt.s32.totalorder %s20, 1
        %s179 = scalar_select %p178, %s20, 1
        %p180 = scmp.lt.s32.totalorder %s177, 1
        %s181 = scalar_select %p180, %s177, 1
        %s182 = smul.addr %s179, 2
        %s183 = sadd.s32 %s181, %s182
        %s184 = smul.addr %s183, 8
        %s185 = scalar_lea.vmem %s0, %s184
        %s186 = smul.u32 2, %s21
        %p187 = scmp.lt.s32.totalorder %s20, 1
        %s188 = scalar_select %p187, %s20, 1
        %s189 = smul.addr %s188, 2
        %s190 = smul.addr %s189, 8
        %s191 = scalar_lea.vmem %s1, %s190
        %s192 = smul.u32 2, %s21
        %v193 = vld [vmem:[%s185] sm:$0xff]
        %v194 = vld [vmem:[%s185 + $0x8] sm:$0xff]
        %v195 = vld [vmem:[%s191] sm:$0xff]
        %v196 = vld [vmem:[%s191 + $0x8] sm:$0xff]
        %vm197 = vcmask 23552
        %v199 = vsel %vm197, %v193, 0
        %v202 = vsel %vm197, %v194, 0
        %v205 = vsel %vm197, %v195, 0
        %v208 = vsel %vm197, %v196, 0
        %210 = vmatpush.xpose.msra.mxu0 0.0
        %211 = vmatpush.xpose.msra.mxu0 0.0
        %212 = vmatpush.xpose.msra.mxu0 0.0
        %213 = vmatpush.xpose.msra.mxu0 0.0
        %214 = vmatpush.xpose.msra.mxu0 0.0
        %215 = vmatpush.xpose.msra.mxu0 0.0
        %216 = vmatpush.xpose.msra.mxu0 0.0
        %217 = vmatpush.xpose.msra.mxu0 0.0
        %218 = vmatpush.xpose.msra.mxu0 0.0
        %219 = vmatpush.xpose.msra.mxu0 0.0
        %220 = vmatpush.xpose.msra.mxu0 0.0
        %221 = vmatpush.xpose.msra.mxu0 0.0
        %222 = vmatpush.xpose.msra.mxu0 0.0
        %223 = vmatpush.xpose.msra.mxu0 0.0
        %224 = vmatpush.xpose.msra.mxu0 %v208
        %225 = vmatpush.xpose.msra.mxu0 %v205
        %226 = vmatmul.f32.gmra.mxu0 %v199
        %v227 = vpop.f32.mrf.mxu0
        %v228 = vadd.f32 0.0, %v227
        %229 = vmatmul.f32.gmra.mxu0 %v202
        %v230 = vpop.f32.mrf.mxu0
        %v231 = vadd.f32 0.0, %v230
        %232 = vdwg.mxu0
        %v233 = vmul.f32 %v193, %v193
        %v234 = vmul.f32 %v194, %v194
        %v235 = vsel %vm197, %v233, 0.0
        %236 = vadd.xlane.f32.xlu0 %v235
        %v237 = vpop.xlane.xlu0 %236
        %v238 = vsel %vm197, %v234, 0.0
        %239 = vadd.xlane.f32.xlu0 %v238
        %v240 = vpop.xlane.xlu0 %239
        %v241 = vmul.f32 %v195, %v195
        %v242 = vmul.f32 %v196, %v196
        %v243 = vsel %vm197, %v241, 0.0
        %244 = vadd.xlane.f32.xlu0 %v243
        %v245 = vpop.xlane.xlu0 %244
        %v246 = vsel %vm197, %v242, 0.0
        %247 = vadd.xlane.f32.xlu0 %v246
        %v248 = vpop.xlane.xlu0 %247
        %v251 = vlaneseq
        %v252 = vand.u32 %v251, 127
        %v253 = vperm.slane %v245, %v252
        %v254 = vadd.s32 %v252, 4294967288
        %v255 = vperm.slane %v248, %v254
        %vm256 = vcmask 130112
        %v257 = vsel %vm256, %v255, %v253
        %vm258 = vcmask 1042434
        %v259 = vsel %vm258, %v257, %v257
        %vm260 = vcmask 1043459
        %v261 = vsel %vm260, %v257, %v259
        %vm262 = vcmask 1044484
        %v263 = vsel %vm262, %v257, %v261
        %vm264 = vcmask 1045509
        %v265 = vsel %vm264, %v257, %v263
        %vm266 = vcmask 1046534
        %v267 = vsel %vm266, %v257, %v265
        %vm268 = vcmask 1047559
        %v269 = vsel %vm268, %v257, %v267
        %v271 = vadd.f32 %v237, %v269
        %v272 = vadd.f32 %v240, %v269
        %v273 = vmul.f32 %v228, 2.0
        %v274 = vmul.f32 %v231, 2.0
        %v275 = vsub.f32 %v271, %v273
        %v276 = vsub.f32 %v272, %v274
        %vm277 = vcmask 130048
        %278 = vst.msk [vmem:[%s176] sm:$0xff] %vm277, %v275
        %279 = vst.msk [vmem:[%s176 + $0x8] sm:$0xff] %vm277, %v276
        %s280 = sand.u32 %s92, 1
        %s281 = scalar_lea.sflag [#allocation3], %s280
        %s282 = sand.u32 %s92, 1
        %s283 = smul.addr %s282, 16
        %s284 = scalar_lea.vmem [#allocation2], %s283
        // Predicated region
        $region29: #{tpu_custom_call.1} parent=27 // pred_check
          %p285 = pneg %p102
        $region30: #{tpu_custom_call.1} parent=27 // pred_check_branch
          %287 = sbr.rel (%p285) target = $region32
        $region31: #{tpu_custom_call.1} parent=27 // pred_region
          %s288 = smul.u32 2, %s21
          %290 = vsyncadd %s281, 0
          %s291 = smul.addr %s20, 2
          %s292 = sadd.s32 %s288, %s291
          %s293 = smul.addr %s292, 8
          %s294 = scalar_lea.hbm %s2, %s293
          %s295 = sshll.u32 %s284, 4
          %s296 = int_to_ptr.vmem [resolvable:$true] %s295
          %s297 = sshll.u32 %s294, 4
          %s298 = int_to_ptr.hbm [resolvable:$true] %s297
          %303 = dma.vmem_to_hbm [thread:$0]  %s296, 256, %s298, %s281, 128, 128, 8
        $region32: #{tpu_custom_call.1} parent=27 // pred_fallthru
          _
      $region28: #{tpu_custom_call.1} parent=5 // pred_fallthru
        _
      %p304 = scmp.le.s32.totalorder 2, %s11
      // Predicated region
      $region33: #{tpu_custom_call.1} parent=5 // pred_check
        %p305 = pneg %p304
      $region34: #{tpu_custom_call.1} parent=5 // pred_check_branch
        %307 = sbr.rel (%p305) target = $region36
      $region35: #{tpu_custom_call.1} parent=5 // pred_region
        %s308 = ssub.s32 %s11, 2
        // Predicated region
        $region37: #{tpu_custom_call.1} parent=35 // pred_check
          %p309 = pneg %p108
        $region38: #{tpu_custom_call.1} parent=35 // pred_check_branch
          %311 = sbr.rel (%p309) target = $region40
        $region39: #{tpu_custom_call.1} parent=35 // pred_region
          %s312 = sand.u32 %s93, 1
          %s313 = scalar_lea.sflag [#allocation3], %s312
          %s314 = sand.u32 %s93, 1
          %s315 = smul.addr %s314, 16
          %s316 = scalar_lea.vmem [#allocation2], %s315
          %318 = dma.done %s313, 256
        $region40: #{tpu_custom_call.1} parent=35 // pred_fallthru
          _
      $region36: #{tpu_custom_call.1} parent=5 // pred_fallthru
        _
    $region6: #{tpu_custom_call.1} parent=1 // loop_footer
      %s15 = sadd.s32 1, %s11
    $region7: #{tpu_custom_call.1} parent=1 // loop_footer_branch
      %10 = sbr.rel target = $region3
    $region8: #{tpu_custom_call.1} parent=1 // loop_exit
      _
    %319 = vsyncpa [#allocation3], 1
    %s320 = scalar_lea.sflag [#allocation3], 1
    %321 = vsyncpa %s320, 1

</llo_original>
